<compile_context>
chip_gen: v7x
topology: tpu7x:2x2x1
jax: 0.10.0
libtpu: 0.0.40
codegen_flags: <defaults>
</compile_context>

<pallas_src>
import jax
import jax.numpy as jnp
from jax.experimental import pallas as pl
from jax.experimental.pallas import tpu as pltpu


def _round_up(x, m):
    return (x + m - 1) // m * m


def _vmem_capacity_bytes():
    """Per-TensorCore VMEM capacity; falls back to 128 MiB (v5e/v6e)."""
    try:
        info = pltpu.get_tpu_info()
        cap = getattr(info, "vmem_capacity_bytes", None)
        if cap:
            return int(cap)
    except Exception:
        pass
    return 128 * 1024 * 1024


def _proj_kernel(p_ref, w_ref, b_ref, o_ref):
    # p_ref: (TM, K)  w_ref: (K, DOUT)  b_ref: (1, DOUT) f32  o_ref: (TM, DOUT)
    acc = jnp.dot(p_ref[...], w_ref[...], preferred_element_type=jnp.float32)
    o_ref[...] = (acc + b_ref[...]).astype(o_ref.dtype)


def _proj_matmul(patches, w_kd, bias2d, *, tm=None, out_dtype=jnp.float32):
    """Pallas tiled matmul: (N, K) @ (K, DOUT) + bias, tiled over rows."""
    n, k = patches.shape
    dout = w_kd.shape[1]

    in_bytes = jnp.dtype(patches.dtype).itemsize
    out_bytes = jnp.dtype(out_dtype).itemsize

    vmem_cap = _vmem_capacity_bytes()
    vmem_budget = int(vmem_cap * 0.75)            # headroom for Mosaic scratch
    two_cores = vmem_cap <= 64 * 1024 * 1024      # v7x: 64 MiB/TC, 2 TCs/chip

    # Lanes get padded to 128 inside VMEM even though HBM stays unpadded.
    k_vmem = _round_up(k, 128)
    d_vmem = _round_up(dout, 128)

    def vmem_need(t):
        return (2 * t * k_vmem * in_bytes          # double-buffered patch tiles
                + 2 * t * d_vmem * out_bytes       # double-buffered output tiles
                + 2 * k_vmem * d_vmem * in_bytes   # weight: 2 buffers too
                + 2 * 8 * d_vmem * 4)              # bias (f32, sublane-padded)

    # Row tile: big on single-TC 128 MiB parts, moderate on 64 MiB 2-TC parts.
    if tm is None:
        tm = 512 if two_cores else 1024
    tm = max(128, min(_round_up(tm, 128), _round_up(n, 128)))
    if n < 128:
        tm = n                                     # full-dim block, still legal
    while tm > 128 and vmem_need(tm) > vmem_budget:
        tm = max(128, _round_up(tm // 2, 128))

    # On 2-TC chips nudge the grid count to an even number so both cores get
    # the same number of tiles (only the last tile of one core is ragged).
    if two_cores and tm > 128:
        t = tm
        while t > 128 and pl.cdiv(n, t) % 2 == 1:
            t -= 128
        if pl.cdiv(n, t) % 2 == 0:
            tm = t

    # Scoped-VMEM limit: cover our need + slack, stay well under physical VMEM.
    vmem_limit = int(min(max(vmem_need(tm) + (8 << 20), 32 << 20),
                         min(int(vmem_cap * 0.85), vmem_cap - (16 << 20))))

    grid = (pl.cdiv(n, tm),)
    cost = pl.CostEstimate(
        flops=2 * n * k * dout,
        transcendentals=0,
        bytes_accessed=n * k * in_bytes + n * dout * out_bytes
        + k * dout * in_bytes + dout * 4,
    )

    out = pl.pallas_call(
        _proj_kernel,
        out_shape=jax.ShapeDtypeStruct((n, dout), out_dtype),
        grid_spec=pltpu.PrefetchScalarGridSpec(
            num_scalar_prefetch=0,
            grid=grid,
            in_specs=[
                pl.BlockSpec((tm, k), lambda i: (i, 0)),
                pl.BlockSpec((k, dout), lambda i: (0, 0)),
                pl.BlockSpec((1, dout), lambda i: (0, 0)),
            ],
            out_specs=pl.BlockSpec((tm, dout), lambda i: (i, 0)),
        ),
        compiler_params=pltpu.CompilerParams(
            dimension_semantics=("parallel",),
            vmem_limit_bytes=vmem_limit,
        ),
        cost_estimate=cost,
    )(patches, w_kd, bias2d)
    return out


def patch_embed_forward(x, weight, bias, stride, padding, *, tm=None,
                        compute_dtype=jnp.bfloat16, out_dtype=None):
    """Equivalent of PatchEmbed.forward (Conv3d path), NCDHW / OIDHW layouts."""
    B, C, T, H, W = x.shape
    dout, C_w, kT, kH, kW = weight.shape
    assert C == C_w
    sT, sH, sW = stride
    pT, pH, pW = padding

    oT = (T + 2 * pT - kT) // sT + 1
    oH = (H + 2 * pH - kH) // sH + 1
    oW = (W + 2 * pW - kW) // sW + 1
    L = oT * oH * oW
    K = C * kT * kH * kW

    cdt = jnp.dtype(compute_dtype)
    odt = jnp.dtype(out_dtype) if out_dtype is not None else x.dtype

    # Channels-last + spatial pad + compute-dtype cast: one input-sized pass.
    # TODO(synk): accept NDHWC input / fold this transpose into a fused-DMA
    #             kernel to drop this extra input read+write.
    xcl = jnp.transpose(x, (0, 2, 3, 4, 1)).astype(cdt)       # (B, T, H, W, C)
    xp = jnp.pad(xcl, ((0, 0), (pT, pT), (pH, pH), (pW, pW), (0, 0)))

    # --- im2col directly in (B*L, K) row-major layout, K ordered (kt,kh,kw,c).
    # No lane zero-padding in HBM: the kernel uses full-K / full-dout blocks
    # and lets Mosaic pad lanes in VMEM for free.
    cols = []
    for kt in range(kT):
        for kh in range(kH):
            for kw in range(kW):
                cols.append(xp[:,
                               kt: kt + sT * oT: sT,
                               kh: kh + sH * oH: sH,
                               kw: kw + sW * oW: sW,
                               :])                             # (B,oT,oH,oW,C)
    patches = jnp.concatenate(cols, axis=-1).reshape(B * L, K)

    # Permute the (tiny) weight to match the (kt, kh, kw, c) K ordering.
    w_kd = jnp.transpose(weight, (2, 3, 4, 1, 0)).reshape(K, dout).astype(cdt)
    b2d = bias.astype(jnp.float32).reshape(1, dout)

    # --- hot path: matmul + bias in Pallas (MXU, f32 accumulation) ----------
    out = _proj_matmul(patches, w_kd, b2d, tm=tm, out_dtype=odt)   # (B*L, dout)

    # conv(x).flatten(2).transpose(1, 2)  ==  (B, L, dout), L ordered (t, h, w)
    return out.reshape(B, L, dout)


def _reference(x, weight, bias, stride, padding):
    pT, pH, pW = padding
    y = jax.lax.conv_general_dilated(
        x, weight,
        window_strides=stride,
        padding=[(pT, pT), (pH, pH), (pW, pW)],
        dimension_numbers=("NCDHW", "OIDHW", "NCDHW"),
    ) + bias.reshape(1, -1, 1, 1, 1)
    B, dout = y.shape[0], y.shape[1]
    return y.reshape(B, dout, -1).transpose(0, 2, 1)


if __name__ == "__main__":
    # Small, module-consistent config: Conv3d, kernel_t = 1 (like (1,16,16)),
    # spatial kernel 4x4, stride (1,2,2), padding (1,1,1).
    B, C, T, H, W = 2, 4, 3, 16, 16
    dim_out = 32
    kernel = (1, 4, 4)
    stride = (1, 2, 2)
    padding = (1, 1, 1)

    key = jax.random.PRNGKey(0)
    kx, kw, kb = jax.random.split(key, 3)
    x = jax.random.normal(kx, (B, C, T, H, W), dtype=jnp.float32)
    weight = 0.05 * jax.random.normal(kw, (dim_out, C) + kernel, dtype=jnp.float32)
    bias = 0.01 * jax.random.normal(kb, (dim_out,), dtype=jnp.float32)

    ref = _reference(x, weight, bias, stride, padding)

    # Exact f32 path.
    out_f32 = patch_embed_forward(x, weight, bias, stride, padding,
                                  compute_dtype=jnp.float32)
    out_f32 = jax.block_until_ready(out_f32)
    assert out_f32.shape == ref.shape, (out_f32.shape, ref.shape)
    assert jnp.allclose(out_f32, ref, atol=1e-4, rtol=1e-4), \
        float(jnp.max(jnp.abs(out_f32 - ref)))

    # Default bf16-compute path (f32 accumulation) -- looser tolerance.
    out_bf16 = patch_embed_forward(x, weight, bias, stride, padding)
    out_bf16 = jax.block_until_ready(out_bf16)
    assert out_bf16.shape == ref.shape, (out_bf16.shape, ref.shape)
    assert jnp.allclose(out_bf16, ref, atol=2e-2, rtol=2e-2), \
        float(jnp.max(jnp.abs(out_bf16 - ref)))

    # bf16-output path (for memory-bound callers) -- shape/sanity check only.
    out_lp = patch_embed_forward(x, weight, bias, stride, padding,
                                 out_dtype=jnp.bfloat16)
    out_lp = jax.block_until_ready(out_lp)
    assert out_lp.shape == ref.shape and out_lp.dtype == jnp.bfloat16

    print("KERNEL_OK")
</pallas_src>

<mosaic_0001>
module attributes {stable_mosaic.version = 11 : i64} {
  func.func @_proj_kernel(%arg0: i32, %arg1: memref<640x64xf32, #tpu.memory_space<vmem>>, %arg2: memref<64x32xf32, #tpu.memory_space<vmem>>, %arg3: memref<1x32xf32, #tpu.memory_space<vmem>>, %arg4: memref<640x32xf32, #tpu.memory_space<vmem>>) attributes {dimension_semantics = [#tpu.dimension_semantics<parallel>], iteration_bounds = array<i64: 1>, scalar_prefetch = 0 : i64, scratch_operands = 0 : i64, tpu.core_type = #tpu.core_type<tc>, window_params = [{transform_indices = @transform_0, window_bounds = array<i64: 640, 64>}, {pipeline_mode = #tpu.pipeline_mode<synchronous>, transform_indices = @transform_1, window_bounds = array<i64: 64, 32>}, {pipeline_mode = #tpu.pipeline_mode<synchronous>, transform_indices = @transform_2, window_bounds = array<i64: 1, 32>}, {transform_indices = @transform_3, window_bounds = array<i64: 640, 32>}]} {
    %c0 = arith.constant 0 : index
    %c0_0 = arith.constant 0 : index
    %0 = vector.load %arg1[%c0, %c0_0] : memref<640x64xf32, #tpu.memory_space<vmem>>, vector<640x64xf32>
    %c0_1 = arith.constant 0 : index
    %c0_2 = arith.constant 0 : index
    %1 = vector.load %arg2[%c0_1, %c0_2] : memref<64x32xf32, #tpu.memory_space<vmem>>, vector<64x32xf32>
    %cst = arith.constant dense<0.000000e+00> : vector<640x32xf32>
    %2 = tpu.matmul %0, %1, %cst {dimension_numbers = #tpu.dot_dimension_numbers<[1], [0], [0], [1], [0, 0, 1, 1], [], []>} : vector<640x64xf32>, vector<64x32xf32>, vector<640x32xf32> -> vector<640x32xf32>
    %c0_3 = arith.constant 0 : index
    %c0_4 = arith.constant 0 : index
    %3 = vector.load %arg3[%c0_3, %c0_4] : memref<1x32xf32, #tpu.memory_space<vmem>>, vector<1x32xf32>
    %4 = vector.broadcast %3 : vector<1x32xf32> to vector<640x32xf32>
    %5 = arith.addf %2, %4 : vector<640x32xf32>
    %c0_5 = arith.constant 0 : index
    %c0_6 = arith.constant 0 : index
    %6 = vector.load %arg4[%c0_5, %c0_6] : memref<640x32xf32, #tpu.memory_space<vmem>>, vector<640x32xf32>
    tpu.vector_store %arg4[%c0_5, %c0_6], %5 {strides = array<i32>} : memref<640x32xf32, #tpu.memory_space<vmem>>, vector<640x32xf32>,
    return
  }
  func.func @transform_0(%arg0: i32) -> (i32, i32) {
    %c0_i32 = arith.constant 0 : i32
    %c0_i32_0 = arith.constant 0 : i32
    return %arg0, %c0_i32 : i32, i32
  }
  func.func @transform_1(%arg0: i32) -> (i32, i32) {
    %c0_i32 = arith.constant 0 : i32
    %c0_i32_0 = arith.constant 0 : i32
    %c0_i32_1 = arith.constant 0 : i32
    return %c0_i32, %c0_i32_0 : i32, i32
  }
  func.func @transform_2(%arg0: i32) -> (i32, i32) {
    %c0_i32 = arith.constant 0 : i32
    %c0_i32_0 = arith.constant 0 : i32
    %c0_i32_1 = arith.constant 0 : i32
    return %c0_i32, %c0_i32_0 : i32, i32
  }
  func.func @transform_3(%arg0: i32) -> (i32, i32) {
    %c0_i32 = arith.constant 0 : i32
    %c0_i32_0 = arith.constant 0 : i32
    return %arg0, %c0_i32 : i32, i32
  }
}

</mosaic_0001>

<llo_original>
// kernel: tpu_custom_call.1
$region0: #{tpu_custom_call.1}
  #allocation0 [shape = 'u32[]', space=smem, size = 0x4, offset = 0x4, fixed_abs, tag = 'smem constant byte address 0x4 - core index']
  #allocation1 [shape = 'u32[144,128]{1,0:T(1,128)}', space=vmem, size = 0x12000, scoped, tag = 'internal scratch']
  %s0 = inlined_call_operand.vmem [shape: f32[640,64], index: 0, kind: input, shape index: {}]
  %s1 = inlined_call_operand.vmem [shape: f32[64,32], index: 1, kind: input, shape index: {}]
  %s2 = inlined_call_operand.vmem [shape: f32[1,32], index: 2, kind: input, shape index: {}]
  %s3 = inlined_call_operand.vmem [shape: f32[640,32], index: 3, kind: output, shape index: {}]
  %s4 = sld [smem:[#allocation0]]
  $region22: #{tpu_custom_call.1} parent=0
    _
  %s6 = ssub.s32 1, %s4
  %s7 = scalar_select 0, %s6, %s4
  // Predicated region
  $region2: #{tpu_custom_call.1} parent=0 // pred_check
    _
  $region3: #{tpu_custom_call.1} parent=0 // pred_check_branch
    %9 = sbr.rel (0) target = $region5
  $region4: #{tpu_custom_call.1} parent=0 // pred_region
    _
  $region5: #{tpu_custom_call.1} parent=0 // pred_fallthru
    _
  // Predicated region
  $region6: #{tpu_custom_call.1} parent=0 // pred_check
    _
  $region7: #{tpu_custom_call.1} parent=0 // pred_check_branch
    %11 = sbr.rel (0) target = $region9
  $region8: #{tpu_custom_call.1} parent=0 // pred_region
    _
  $region9: #{tpu_custom_call.1} parent=0 // pred_fallthru
    _
  // Predicated region
  $region10: #{tpu_custom_call.1} parent=0 // pred_check
    _
  $region11: #{tpu_custom_call.1} parent=0 // pred_check_branch
    %13 = sbr.rel (0) target = $region13
  $region12: #{tpu_custom_call.1} parent=0 // pred_region
    _
  $region13: #{tpu_custom_call.1} parent=0 // pred_fallthru
    _
  %v14 = vld [vmem:[%s0] sm:$0xff]
  %v15 = vld [vmem:[%s0 + $0x8] sm:$0xff]
  %v16 = vld [vmem:[%s0 + $0x10] sm:$0xff]
  %v17 = vld [vmem:[%s0 + $0x18] sm:$0xff]
  %v18 = vld [vmem:[%s0 + $0x20] sm:$0xff]
  %v19 = vld [vmem:[%s0 + $0x28] sm:$0xff]
  %v20 = vld [vmem:[%s0 + $0x30] sm:$0xff]
  %v21 = vld [vmem:[%s0 + $0x38] sm:$0xff]
  %v22 = vld [vmem:[%s0 + $0x40] sm:$0xff]
  %v23 = vld [vmem:[%s0 + $0x48] sm:$0xff]
  %v24 = vld [vmem:[%s0 + $0x50] sm:$0xff]
  %v25 = vld [vmem:[%s0 + $0x58] sm:$0xff]
  %v26 = vld [vmem:[%s0 + $0x60] sm:$0xff]
  %v27 = vld [vmem:[%s0 + $0x68] sm:$0xff]
  %v28 = vld [vmem:[%s0 + $0x70] sm:$0xff]
  %v29 = vld [vmem:[%s0 + $0x78] sm:$0xff]
  %v30 = vld [vmem:[%s0 + $0x80] sm:$0xff]
  %v31 = vld [vmem:[%s0 + $0x88] sm:$0xff]
  %v32 = vld [vmem:[%s0 + $0x90] sm:$0xff]
  %v33 = vld [vmem:[%s0 + $0x98] sm:$0xff]
  %v34 = vld [vmem:[%s0 + $0xa0] sm:$0xff]
  %v35 = vld [vmem:[%s0 + $0xa8] sm:$0xff]
  %v36 = vld [vmem:[%s0 + $0xb0] sm:$0xff]
  %v37 = vld [vmem:[%s0 + $0xb8] sm:$0xff]
  %v38 = vld [vmem:[%s0 + $0xc0] sm:$0xff]
  %v39 = vld [vmem:[%s0 + $0xc8] sm:$0xff]
  %v40 = vld [vmem:[%s0 + $0xd0] sm:$0xff]
  %v41 = vld [vmem:[%s0 + $0xd8] sm:$0xff]
  %v42 = vld [vmem:[%s0 + $0xe0] sm:$0xff]
  %v43 = vld [vmem:[%s0 + $0xe8] sm:$0xff]
  %v44 = vld [vmem:[%s0 + $0xf0] sm:$0xff]
  %v45 = vld [vmem:[%s0 + $0xf8] sm:$0xff]
  %v46 = vld [vmem:[%s0 + $0x100] sm:$0xff]
  %v47 = vld [vmem:[%s0 + $0x108] sm:$0xff]
  %v48 = vld [vmem:[%s0 + $0x110] sm:$0xff]
  %v49 = vld [vmem:[%s0 + $0x118] sm:$0xff]
  %v50 = vld [vmem:[%s0 + $0x120] sm:$0xff]
  %v51 = vld [vmem:[%s0 + $0x128] sm:$0xff]
  %v52 = vld [vmem:[%s0 + $0x130] sm:$0xff]
  %v53 = vld [vmem:[%s0 + $0x138] sm:$0xff]
  %v54 = vld [vmem:[%s0 + $0x140] sm:$0xff]
  %v55 = vld [vmem:[%s0 + $0x148] sm:$0xff]
  %v56 = vld [vmem:[%s0 + $0x150] sm:$0xff]
  %v57 = vld [vmem:[%s0 + $0x158] sm:$0xff]
  %v58 = vld [vmem:[%s0 + $0x160] sm:$0xff]
  %v59 = vld [vmem:[%s0 + $0x168] sm:$0xff]
  %v60 = vld [vmem:[%s0 + $0x170] sm:$0xff]
  %v61 = vld [vmem:[%s0 + $0x178] sm:$0xff]
  %v62 = vld [vmem:[%s0 + $0x180] sm:$0xff]
  %v63 = vld [vmem:[%s0 + $0x188] sm:$0xff]
  %v64 = vld [vmem:[%s0 + $0x190] sm:$0xff]
  %v65 = vld [vmem:[%s0 + $0x198] sm:$0xff]
  %v66 = vld [vmem:[%s0 + $0x1a0] sm:$0xff]
  %v67 = vld [vmem:[%s0 + $0x1a8] sm:$0xff]
  %v68 = vld [vmem:[%s0 + $0x1b0] sm:$0xff]
  %v69 = vld [vmem:[%s0 + $0x1b8] sm:$0xff]
  %v70 = vld [vmem:[%s0 + $0x1c0] sm:$0xff]
  %v71 = vld [vmem:[%s0 + $0x1c8] sm:$0xff]
  %v72 = vld [vmem:[%s0 + $0x1d0] sm:$0xff]
  %v73 = vld [vmem:[%s0 + $0x1d8] sm:$0xff]
  %v74 = vld [vmem:[%s0 + $0x1e0] sm:$0xff]
  %v75 = vld [vmem:[%s0 + $0x1e8] sm:$0xff]
  %v76 = vld [vmem:[%s0 + $0x1f0] sm:$0xff]
  %v77 = vld [vmem:[%s0 + $0x1f8] sm:$0xff]
  %v78 = vld [vmem:[%s0 + $0x200] sm:$0xff]
  %v79 = vld [vmem:[%s0 + $0x208] sm:$0xff]
  %v80 = vld [vmem:[%s0 + $0x210] sm:$0xff]
  %v81 = vld [vmem:[%s0 + $0x218] sm:$0xff]
  %v82 = vld [vmem:[%s0 + $0x220] sm:$0xff]
  %v83 = vld [vmem:[%s0 + $0x228] sm:$0xff]
  %v84 = vld [vmem:[%s0 + $0x230] sm:$0xff]
  %v85 = vld [vmem:[%s0 + $0x238] sm:$0xff]
  %v86 = vld [vmem:[%s0 + $0x240] sm:$0xff]
  %v87 = vld [vmem:[%s0 + $0x248] sm:$0xff]
  %v88 = vld [vmem:[%s0 + $0x250] sm:$0xff]
  %v89 = vld [vmem:[%s0 + $0x258] sm:$0xff]
  %v90 = vld [vmem:[%s0 + $0x260] sm:$0xff]
  %v91 = vld [vmem:[%s0 + $0x268] sm:$0xff]
  %v92 = vld [vmem:[%s0 + $0x270] sm:$0xff]
  %v93 = vld [vmem:[%s0 + $0x278] sm:$0xff]
  %v94 = vld [vmem:[%s1] sm:$0xff]
  %v95 = vld [vmem:[%s1 + $0x8] sm:$0xff]
  %v96 = vld [vmem:[%s1 + $0x10] sm:$0xff]
  %v97 = vld [vmem:[%s1 + $0x18] sm:$0xff]
  %v98 = vld [vmem:[%s1 + $0x20] sm:$0xff]
  %v99 = vld [vmem:[%s1 + $0x28] sm:$0xff]
  %v100 = vld [vmem:[%s1 + $0x30] sm:$0xff]
  %v101 = vld [vmem:[%s1 + $0x38] sm:$0xff]
  %v102 = vld [vmem:[%s2] sm:$0x1]
  %v104 = vlaneseq
  %v105 = vshrl.u32 %v104, 7
  %v106 = vsub.s32 0, %v105
  %v107 = vrot.slane %v102, %v106
  %vm109 = vcmask 523264
  %v111 = vsel %vm109, %v14, 0
  %v114 = vsel %vm109, %v15, 0
  %v117 = vsel %vm109, %v16, 0
  %v120 = vsel %vm109, %v17, 0
  %v123 = vsel %vm109, %v18, 0
  %v126 = vsel %vm109, %v19, 0
  %v129 = vsel %vm109, %v20, 0
  %v132 = vsel %vm109, %v21, 0
  %v135 = vsel %vm109, %v22, 0
  %v138 = vsel %vm109, %v23, 0
  %v141 = vsel %vm109, %v24, 0
  %v144 = vsel %vm109, %v25, 0
  %v147 = vsel %vm109, %v26, 0
  %v150 = vsel %vm109, %v27, 0
  %v153 = vsel %vm109, %v28, 0
  %v156 = vsel %vm109, %v29, 0
  %v159 = vsel %vm109, %v30, 0
  %v162 = vsel %vm109, %v31, 0
  %v165 = vsel %vm109, %v32, 0
  %v168 = vsel %vm109, %v33, 0
  %v171 = vsel %vm109, %v34, 0
  %v174 = vsel %vm109, %v35, 0
  %v177 = vsel %vm109, %v36, 0
  %v180 = vsel %vm109, %v37, 0
  %v183 = vsel %vm109, %v38, 0
  %v186 = vsel %vm109, %v39, 0
  %v189 = vsel %vm109, %v40, 0
  %v192 = vsel %vm109, %v41, 0
  %v195 = vsel %vm109, %v42, 0
  %v198 = vsel %vm109, %v43, 0
  %v201 = vsel %vm109, %v44, 0
  %v204 = vsel %vm109, %v45, 0
  %v207 = vsel %vm109, %v46, 0
  %v210 = vsel %vm109, %v47, 0
  %v213 = vsel %vm109, %v48, 0
  %v216 = vsel %vm109, %v49, 0
  %v219 = vsel %vm109, %v50, 0
  %v222 = vsel %vm109, %v51, 0
  %v225 = vsel %vm109, %v52, 0
  %v228 = vsel %vm109, %v53, 0
  %v231 = vsel %vm109, %v54, 0
  %v234 = vsel %vm109, %v55, 0
  %v237 = vsel %vm109, %v56, 0
  %v240 = vsel %vm109, %v57, 0
  %v243 = vsel %vm109, %v58, 0
  %v246 = vsel %vm109, %v59, 0
  %v249 = vsel %vm109, %v60, 0
  %v252 = vsel %vm109, %v61, 0
  %v255 = vsel %vm109, %v62, 0
  %v258 = vsel %vm109, %v63, 0
  %v261 = vsel %vm109, %v64, 0
  %v264 = vsel %vm109, %v65, 0
  %v267 = vsel %vm109, %v66, 0
  %v270 = vsel %vm109, %v67, 0
  %v273 = vsel %vm109, %v68, 0
  %v276 = vsel %vm109, %v69, 0
  %v279 = vsel %vm109, %v70, 0
  %v282 = vsel %vm109, %v71, 0
  %v285 = vsel %vm109, %v72, 0
  %v288 = vsel %vm109, %v73, 0
  %v291 = vsel %vm109, %v74, 0
  %v294 = vsel %vm109, %v75, 0
  %v297 = vsel %vm109, %v76, 0
  %v300 = vsel %vm109, %v77, 0
  %v303 = vsel %vm109, %v78, 0
  %v306 = vsel %vm109, %v79, 0
  %v309 = vsel %vm109, %v80, 0
  %v312 = vsel %vm109, %v81, 0
  %v315 = vsel %vm109, %v82, 0
  %v318 = vsel %vm109, %v83, 0
  %v321 = vsel %vm109, %v84, 0
  %v324 = vsel %vm109, %v85, 0
  %v327 = vsel %vm109, %v86, 0
  %v330 = vsel %vm109, %v87, 0
  %v333 = vsel %vm109, %v88, 0
  %v336 = vsel %vm109, %v89, 0
  %v339 = vsel %vm109, %v90, 0
  %v342 = vsel %vm109, %v91, 0
  %v345 = vsel %vm109, %v92, 0
  %v348 = vsel %vm109, %v93, 0
  %350 = vmatprep.subr.mxu0 0.0
  %351 = vmatpush1.msra.mxu0 %v94
  %352 = vmatprep.subr.mxu0 0.0
  %353 = vmatpush1.msra.mxu0 %v95
  %354 = vmatprep.subr.mxu0 0.0
  %355 = vmatpush1.msra.mxu0 %v96
  %356 = vmatprep.subr.mxu0 0.0
  %357 = vmatpush1.msra.mxu0 %v97
  %358 = vmatprep.subr.mxu0 0.0
  %359 = vmatpush1.msra.mxu0 %v98
  %360 = vmatprep.subr.mxu0 0.0
  %361 = vmatpush1.msra.mxu0 %v99
  %362 = vmatprep.subr.mxu0 0.0
  %363 = vmatpush1.msra.mxu0 %v100
  %364 = vmatprep.subr.mxu0 0.0
  %365 = vmatpush1.msra.mxu0 %v101
  %366 = vmatprep.subr.mxu0 0.0
  %367 = vmatpush1.msra.mxu0 0.0
  %368 = vmatprep.subr.mxu0 0.0
  %369 = vmatpush1.msra.mxu0 0.0
  %370 = vmatprep.subr.mxu0 0.0
  %371 = vmatpush1.msra.mxu0 0.0
  %372 = vmatprep.subr.mxu0 0.0
  %373 = vmatpush1.msra.mxu0 0.0
  %374 = vmatprep.subr.mxu0 0.0
  %375 = vmatpush1.msra.mxu0 0.0
  %376 = vmatprep.subr.mxu0 0.0
  %377 = vmatpush1.msra.mxu0 0.0
  %378 = vmatprep.subr.mxu0 0.0
  %379 = vmatpush1.msra.mxu0 0.0
  %380 = vmatprep.subr.mxu0 0.0
  %381 = vmatpush1.msra.mxu0 0.0
  %382 = vmatprep.subr.mxu0 0.0
  %383 = vmatpush1.msra.mxu0 0.0
  %384 = vmatprep.subr.mxu0 0.0
  %385 = vmatpush1.msra.mxu0 0.0
  %386 = vmatprep.subr.mxu0 0.0
  %387 = vmatpush1.msra.mxu0 0.0
  %388 = vmatprep.subr.mxu0 0.0
  %389 = vmatpush1.msra.mxu0 0.0
  %390 = vmatprep.subr.mxu0 0.0
  %391 = vmatpush1.msra.mxu0 0.0
  %392 = vmatprep.subr.mxu0 0.0
  %393 = vmatpush1.msra.mxu0 0.0
  %394 = vmatprep.subr.mxu0 0.0
  %395 = vmatpush1.msra.mxu0 0.0
  %396 = vmatprep.subr.mxu0 0.0
  %397 = vmatpush1.msra.mxu0 0.0
  %398 = vmatprep.subr.mxu0 0.0
  %399 = vmatpush1.msra.mxu0 0.0
  %400 = vmatprep.subr.mxu0 0.0
  %401 = vmatpush1.msra.mxu0 0.0
  %402 = vmatprep.subr.mxu0 0.0
  %403 = vmatpush1.msra.mxu0 0.0
  %404 = vmatprep.subr.mxu0 0.0
  %405 = vmatpush1.msra.mxu0 0.0
  %406 = vmatprep.subr.mxu0 0.0
  %407 = vmatpush1.msra.mxu0 0.0
  %408 = vmatprep.subr.mxu0 0.0
  %409 = vmatpush1.msra.mxu0 0.0
  %410 = vmatprep.subr.mxu0 0.0
  %411 = vmatpush1.msra.mxu0 0.0
  %412 = vmatprep.subr.mxu0 0.0
  %413 = vmatpush1.msra.mxu0 0.0
  %414 = vmatprep.mubr.f32.mxu0 0.0
  %415 = vmatmul.mubr.f32.gmra.mrb[0].mxu0 %v111
  %v416 = vpop.f32.mrb[0].mxu0
  %v417 = vadd.f32 %v107, %v416
  %v418 = vpop.f32.mrb[0].mxu0
  %419 = vmatprep.mubr.f32.mxu0 0.0
  %420 = vmatmul.mubr.f32.gmra.mrb[0].mxu0 %v114
  %v421 = vpop.f32.mrb[0].mxu0
  %v422 = vadd.f32 %v107, %v421
  %v423 = vpop.f32.mrb[0].mxu0
  %424 = vmatprep.mubr.f32.mxu0 0.0
  %425 = vmatmul.mubr.f32.gmra.mrb[0].mxu0 %v117
  %v426 = vpop.f32.mrb[0].mxu0
  %v427 = vadd.f32 %v107, %v426
  %v428 = vpop.f32.mrb[0].mxu0
  %429 = vmatprep.mubr.f32.mxu0 0.0
  %430 = vmatmul.mubr.f32.gmra.mrb[0].mxu0 %v120
  %v431 = vpop.f32.mrb[0].mxu0
  %v432 = vadd.f32 %v107, %v431
  %v433 = vpop.f32.mrb[0].mxu0
  %434 = vmatprep.mubr.f32.mxu0 0.0
  %435 = vmatmul.mubr.f32.gmra.mrb[0].mxu0 %v123
  %v436 = vpop.f32.mrb[0].mxu0
  %v437 = vadd.f32 %v107, %v436
  %v438 = vpop.f32.mrb[0].mxu0
  %439 = vmatprep.mubr.f32.mxu0 0.0
  %440 = vmatmul.mubr.f32.gmra.mrb[0].mxu0 %v126
  %v441 = vpop.f32.mrb[0].mxu0
  %v442 = vadd.f32 %v107, %v441
  %v443 = vpop.f32.mrb[0].mxu0
  %444 = vmatprep.mubr.f32.mxu0 0.0
  %445 = vmatmul.mubr.f32.gmra.mrb[0].mxu0 %v129
  %v446 = vpop.f32.mrb[0].mxu0
  %v447 = vadd.f32 %v107, %v446
  %v448 = vpop.f32.mrb[0].mxu0
  %449 = vmatprep.mubr.f32.mxu0 0.0
  %450 = vmatmul.mubr.f32.gmra.mrb[0].mxu0 %v132
  %v451 = vpop.f32.mrb[0].mxu0
  %v452 = vadd.f32 %v107, %v451
  %v453 = vpop.f32.mrb[0].mxu0
  %454 = vmatprep.mubr.f32.mxu0 0.0
  %455 = vmatmul.mubr.f32.gmra.mrb[0].mxu0 %v135
  %v456 = vpop.f32.mrb[0].mxu0
  %v457 = vadd.f32 %v107, %v456
  %v458 = vpop.f32.mrb[0].mxu0
  %459 = vmatprep.mubr.f32.mxu0 0.0
  %460 = vmatmul.mubr.f32.gmra.mrb[0].mxu0 %v138
  %v461 = vpop.f32.mrb[0].mxu0
  %v462 = vadd.f32 %v107, %v461
  %v463 = vpop.f32.mrb[0].mxu0
  %464 = vmatprep.mubr.f32.mxu0 0.0
  %465 = vmatmul.mubr.f32.gmra.mrb[0].mxu0 %v141
  %v466 = vpop.f32.mrb[0].mxu0
  %v467 = vadd.f32 %v107, %v466
  %v468 = vpop.f32.mrb[0].mxu0
  %469 = vmatprep.mubr.f32.mxu0 0.0
  %470 = vmatmul.mubr.f32.gmra.mrb[0].mxu0 %v144
  %v471 = vpop.f32.mrb[0].mxu0
  %v472 = vadd.f32 %v107, %v471
  %v473 = vpop.f32.mrb[0].mxu0
  %474 = vmatprep.mubr.f32.mxu0 0.0
  %475 = vmatmul.mubr.f32.gmra.mrb[0].mxu0 %v147
  %v476 = vpop.f32.mrb[0].mxu0
  %v477 = vadd.f32 %v107, %v476
  %v478 = vpop.f32.mrb[0].mxu0
  %479 = vmatprep.mubr.f32.mxu0 0.0
  %480 = vmatmul.mubr.f32.gmra.mrb[0].mxu0 %v150
  %v481 = vpop.f32.mrb[0].mxu0
  %v482 = vadd.f32 %v107, %v481
  %v483 = vpop.f32.mrb[0].mxu0
  %484 = vmatprep.mubr.f32.mxu0 0.0
  %485 = vmatmul.mubr.f32.gmra.mrb[0].mxu0 %v153
  %v486 = vpop.f32.mrb[0].mxu0
  %v487 = vadd.f32 %v107, %v486
  %v488 = vpop.f32.mrb[0].mxu0
  %489 = vmatprep.mubr.f32.mxu0 0.0
  %490 = vmatmul.mubr.f32.gmra.mrb[0].mxu0 %v156
  %v491 = vpop.f32.mrb[0].mxu0
  %v492 = vadd.f32 %v107, %v491
  %v493 = vpop.f32.mrb[0].mxu0
  %494 = vmatprep.mubr.f32.mxu0 0.0
  %495 = vmatmul.mubr.f32.gmra.mrb[0].mxu0 %v159
  %v496 = vpop.f32.mrb[0].mxu0
  %v497 = vadd.f32 %v107, %v496
  %v498 = vpop.f32.mrb[0].mxu0
  %499 = vmatprep.mubr.f32.mxu0 0.0
  %500 = vmatmul.mubr.f32.gmra.mrb[0].mxu0 %v162
  %v501 = vpop.f32.mrb[0].mxu0
  %v502 = vadd.f32 %v107, %v501
  %v503 = vpop.f32.mrb[0].mxu0
  %504 = vmatprep.mubr.f32.mxu0 0.0
  %505 = vmatmul.mubr.f32.gmra.mrb[0].mxu0 %v165
  %v506 = vpop.f32.mrb[0].mxu0
  %v507 = vadd.f32 %v107, %v506
  %v508 = vpop.f32.mrb[0].mxu0
  %509 = vmatprep.mubr.f32.mxu0 0.0
  %510 = vmatmul.mubr.f32.gmra.mrb[0].mxu0 %v168
  %v511 = vpop.f32.mrb[0].mxu0
  %v512 = vadd.f32 %v107, %v511
  %v513 = vpop.f32.mrb[0].mxu0
  %514 = vmatprep.mubr.f32.mxu0 0.0
  %515 = vmatmul.mubr.f32.gmra.mrb[0].mxu0 %v171
  %v516 = vpop.f32.mrb[0].mxu0
  %v517 = vadd.f32 %v107, %v516
  %v518 = vpop.f32.mrb[0].mxu0
  %519 = vmatprep.mubr.f32.mxu0 0.0
  %520 = vmatmul.mubr.f32.gmra.mrb[0].mxu0 %v174
  %v521 = vpop.f32.mrb[0].mxu0
  %v522 = vadd.f32 %v107, %v521
  %v523 = vpop.f32.mrb[0].mxu0
  %524 = vmatprep.mubr.f32.mxu0 0.0
  %525 = vmatmul.mubr.f32.gmra.mrb[0].mxu0 %v177
  %v526 = vpop.f32.mrb[0].mxu0
  %v527 = vadd.f32 %v107, %v526
  %v528 = vpop.f32.mrb[0].mxu0
  %529 = vmatprep.mubr.f32.mxu0 0.0
  %530 = vmatmul.mubr.f32.gmra.mrb[0].mxu0 %v180
  %v531 = vpop.f32.mrb[0].mxu0
  %v532 = vadd.f32 %v107, %v531
  %v533 = vpop.f32.mrb[0].mxu0
  %534 = vmatprep.mubr.f32.mxu0 0.0
  %535 = vmatmul.mubr.f32.gmra.mrb[0].mxu0 %v183
  %v536 = vpop.f32.mrb[0].mxu0
  %v537 = vadd.f32 %v107, %v536
  %v538 = vpop.f32.mrb[0].mxu0
  %539 = vmatprep.mubr.f32.mxu0 0.0
  %540 = vmatmul.mubr.f32.gmra.mrb[0].mxu0 %v186
  %v541 = vpop.f32.mrb[0].mxu0
  %v542 = vadd.f32 %v107, %v541
  %v543 = vpop.f32.mrb[0].mxu0
  %544 = vmatprep.mubr.f32.mxu0 0.0
  %545 = vmatmul.mubr.f32.gmra.mrb[0].mxu0 %v189
  %v546 = vpop.f32.mrb[0].mxu0
  %v547 = vadd.f32 %v107, %v546
  %v548 = vpop.f32.mrb[0].mxu0
  %549 = vmatprep.mubr.f32.mxu0 0.0
  %550 = vmatmul.mubr.f32.gmra.mrb[0].mxu0 %v192
  %v551 = vpop.f32.mrb[0].mxu0
  %v552 = vadd.f32 %v107, %v551
  %v553 = vpop.f32.mrb[0].mxu0
  %554 = vmatprep.mubr.f32.mxu0 0.0
  %555 = vmatmul.mubr.f32.gmra.mrb[0].mxu0 %v195
  %v556 = vpop.f32.mrb[0].mxu0
  %v557 = vadd.f32 %v107, %v556
  %v558 = vpop.f32.mrb[0].mxu0
  %559 = vmatprep.mubr.f32.mxu0 0.0
  %560 = vmatmul.mubr.f32.gmra.mrb[0].mxu0 %v198
  %v561 = vpop.f32.mrb[0].mxu0
  %v562 = vadd.f32 %v107, %v561
  %v563 = vpop.f32.mrb[0].mxu0
  %564 = vmatprep.mubr.f32.mxu0 0.0
  %565 = vmatmul.mubr.f32.gmra.mrb[0].mxu0 %v201
  %v566 = vpop.f32.mrb[0].mxu0
  %v567 = vadd.f32 %v107, %v566
  %v568 = vpop.f32.mrb[0].mxu0
  %569 = vmatprep.mubr.f32.mxu0 0.0
  %570 = vmatmul.mubr.f32.gmra.mrb[0].mxu0 %v204
  %v571 = vpop.f32.mrb[0].mxu0
  %v572 = vadd.f32 %v107, %v571
  %v573 = vpop.f32.mrb[0].mxu0
  %574 = vmatprep.mubr.f32.mxu0 0.0
  %575 = vmatmul.mubr.f32.gmra.mrb[0].mxu0 %v207
  %v576 = vpop.f32.mrb[0].mxu0
  %v577 = vadd.f32 %v107, %v576
  %v578 = vpop.f32.mrb[0].mxu0
  %579 = vmatprep.mubr.f32.mxu0 0.0
  %580 = vmatmul.mubr.f32.gmra.mrb[0].mxu0 %v210
  %v581 = vpop.f32.mrb[0].mxu0
  %v582 = vadd.f32 %v107, %v581
  %v583 = vpop.f32.mrb[0].mxu0
  %584 = vmatprep.mubr.f32.mxu0 0.0
  %585 = vmatmul.mubr.f32.gmra.mrb[0].mxu0 %v213
  %v586 = vpop.f32.mrb[0].mxu0
  %v587 = vadd.f32 %v107, %v586
  %v588 = vpop.f32.mrb[0].mxu0
  %589 = vmatprep.mubr.f32.mxu0 0.0
  %590 = vmatmul.mubr.f32.gmra.mrb[0].mxu0 %v216
  %v591 = vpop.f32.mrb[0].mxu0
  %v592 = vadd.f32 %v107, %v591
  %v593 = vpop.f32.mrb[0].mxu0
  %594 = vmatprep.mubr.f32.mxu0 0.0
  %595 = vmatmul.mubr.f32.gmra.mrb[0].mxu0 %v219
  %v596 = vpop.f32.mrb[0].mxu0
  %v597 = vadd.f32 %v107, %v596
  %v598 = vpop.f32.mrb[0].mxu0
  %599 = vmatprep.mubr.f32.mxu0 0.0
  %600 = vmatmul.mubr.f32.gmra.mrb[0].mxu0 %v222
  %v601 = vpop.f32.mrb[0].mxu0
  %v602 = vadd.f32 %v107, %v601
  %v603 = vpop.f32.mrb[0].mxu0
  %604 = vmatprep.mubr.f32.mxu0 0.0
  %605 = vmatmul.mubr.f32.gmra.mrb[0].mxu0 %v225
  %v606 = vpop.f32.mrb[0].mxu0
  %v607 = vadd.f32 %v107, %v606
  %v608 = vpop.f32.mrb[0].mxu0
  %609 = vmatprep.mubr.f32.mxu0 0.0
  %610 = vmatmul.mubr.f32.gmra.mrb[0].mxu0 %v228
  %v611 = vpop.f32.mrb[0].mxu0
  %v612 = vadd.f32 %v107, %v611
  %v613 = vpop.f32.mrb[0].mxu0
  %614 = vmatprep.mubr.f32.mxu0 0.0
  %615 = vmatmul.mubr.f32.gmra.mrb[0].mxu0 %v231
  %v616 = vpop.f32.mrb[0].mxu0
  %v617 = vadd.f32 %v107, %v616
  %v618 = vpop.f32.mrb[0].mxu0
  %619 = vmatprep.mubr.f32.mxu0 0.0
  %620 = vmatmul.mubr.f32.gmra.mrb[0].mxu0 %v234
  %v621 = vpop.f32.mrb[0].mxu0
  %v622 = vadd.f32 %v107, %v621
  %v623 = vpop.f32.mrb[0].mxu0
  %624 = vmatprep.mubr.f32.mxu0 0.0
  %625 = vmatmul.mubr.f32.gmra.mrb[0].mxu0 %v237
  %v626 = vpop.f32.mrb[0].mxu0
  %v627 = vadd.f32 %v107, %v626
  %v628 = vpop.f32.mrb[0].mxu0
  %629 = vmatprep.mubr.f32.mxu0 0.0
  %630 = vmatmul.mubr.f32.gmra.mrb[0].mxu0 %v240
  %v631 = vpop.f32.mrb[0].mxu0
  %v632 = vadd.f32 %v107, %v631
  %v633 = vpop.f32.mrb[0].mxu0
  %634 = vmatprep.mubr.f32.mxu0 0.0
  %635 = vmatmul.mubr.f32.gmra.mrb[0].mxu0 %v243
  %v636 = vpop.f32.mrb[0].mxu0
  %v637 = vadd.f32 %v107, %v636
  %v638 = vpop.f32.mrb[0].mxu0
  %639 = vmatprep.mubr.f32.mxu0 0.0
  %640 = vmatmul.mubr.f32.gmra.mrb[0].mxu0 %v246
  %v641 = vpop.f32.mrb[0].mxu0
  %v642 = vadd.f32 %v107, %v641
  %v643 = vpop.f32.mrb[0].mxu0
  %644 = vmatprep.mubr.f32.mxu0 0.0
  %645 = vmatmul.mubr.f32.gmra.mrb[0].mxu0 %v249
  %v646 = vpop.f32.mrb[0].mxu0
  %v647 = vadd.f32 %v107, %v646
  %v648 = vpop.f32.mrb[0].mxu0
  %649 = vmatprep.mubr.f32.mxu0 0.0
  %650 = vmatmul.mubr.f32.gmra.mrb[0].mxu0 %v252
  %v651 = vpop.f32.mrb[0].mxu0
  %v652 = vadd.f32 %v107, %v651
  %v653 = vpop.f32.mrb[0].mxu0
  %654 = vmatprep.mubr.f32.mxu0 0.0
  %655 = vmatmul.mubr.f32.gmra.mrb[0].mxu0 %v255
  %v656 = vpop.f32.mrb[0].mxu0
  %v657 = vadd.f32 %v107, %v656
  %v658 = vpop.f32.mrb[0].mxu0
  %659 = vmatprep.mubr.f32.mxu0 0.0
  %660 = vmatmul.mubr.f32.gmra.mrb[0].mxu0 %v258
  %v661 = vpop.f32.mrb[0].mxu0
  %v662 = vadd.f32 %v107, %v661
  %v663 = vpop.f32.mrb[0].mxu0
  %664 = vmatprep.mubr.f32.mxu0 0.0
  %665 = vmatmul.mubr.f32.gmra.mrb[0].mxu0 %v261
  %v666 = vpop.f32.mrb[0].mxu0
  %v667 = vadd.f32 %v107, %v666
  %v668 = vpop.f32.mrb[0].mxu0
  %669 = vmatprep.mubr.f32.mxu0 0.0
  %670 = vmatmul.mubr.f32.gmra.mrb[0].mxu0 %v264
  %v671 = vpop.f32.mrb[0].mxu0
  %v672 = vadd.f32 %v107, %v671
  %v673 = vpop.f32.mrb[0].mxu0
  %674 = vmatprep.mubr.f32.mxu0 0.0
  %675 = vmatmul.mubr.f32.gmra.mrb[0].mxu0 %v267
  %v676 = vpop.f32.mrb[0].mxu0
  %v677 = vadd.f32 %v107, %v676
  %v678 = vpop.f32.mrb[0].mxu0
  %679 = vmatprep.mubr.f32.mxu0 0.0
  %680 = vmatmul.mubr.f32.gmra.mrb[0].mxu0 %v270
  %v681 = vpop.f32.mrb[0].mxu0
  %v682 = vadd.f32 %v107, %v681
  %v683 = vpop.f32.mrb[0].mxu0
  %684 = vmatprep.mubr.f32.mxu0 0.0
  %685 = vmatmul.mubr.f32.gmra.mrb[0].mxu0 %v273
  %v686 = vpop.f32.mrb[0].mxu0
  %v687 = vadd.f32 %v107, %v686
  %v688 = vpop.f32.mrb[0].mxu0
  %689 = vmatprep.mubr.f32.mxu0 0.0
  %690 = vmatmul.mubr.f32.gmra.mrb[0].mxu0 %v276
  %v691 = vpop.f32.mrb[0].mxu0
  %v692 = vadd.f32 %v107, %v691
  %v693 = vpop.f32.mrb[0].mxu0
  %694 = vmatprep.mubr.f32.mxu0 0.0
  %695 = vmatmul.mubr.f32.gmra.mrb[0].mxu0 %v279
  %v696 = vpop.f32.mrb[0].mxu0
  %v697 = vadd.f32 %v107, %v696
  %v698 = vpop.f32.mrb[0].mxu0
  %699 = vmatprep.mubr.f32.mxu0 0.0
  %700 = vmatmul.mubr.f32.gmra.mrb[0].mxu0 %v282
  %v701 = vpop.f32.mrb[0].mxu0
  %v702 = vadd.f32 %v107, %v701
  %v703 = vpop.f32.mrb[0].mxu0
  %704 = vmatprep.mubr.f32.mxu0 0.0
  %705 = vmatmul.mubr.f32.gmra.mrb[0].mxu0 %v285
  %v706 = vpop.f32.mrb[0].mxu0
  %v707 = vadd.f32 %v107, %v706
  %v708 = vpop.f32.mrb[0].mxu0
  %709 = vmatprep.mubr.f32.mxu0 0.0
  %710 = vmatmul.mubr.f32.gmra.mrb[0].mxu0 %v288
  %v711 = vpop.f32.mrb[0].mxu0
  %v712 = vadd.f32 %v107, %v711
  %v713 = vpop.f32.mrb[0].mxu0
  %714 = vmatprep.mubr.f32.mxu0 0.0
  %715 = vmatmul.mubr.f32.gmra.mrb[0].mxu0 %v291
  %v716 = vpop.f32.mrb[0].mxu0
  %v717 = vadd.f32 %v107, %v716
  %v718 = vpop.f32.mrb[0].mxu0
  %719 = vmatprep.mubr.f32.mxu0 0.0
  %720 = vmatmul.mubr.f32.gmra.mrb[0].mxu0 %v294
  %v721 = vpop.f32.mrb[0].mxu0
  %v722 = vadd.f32 %v107, %v721
  %v723 = vpop.f32.mrb[0].mxu0
  %724 = vmatprep.mubr.f32.mxu0 0.0
  %725 = vmatmul.mubr.f32.gmra.mrb[0].mxu0 %v297
  %v726 = vpop.f32.mrb[0].mxu0
  %v727 = vadd.f32 %v107, %v726
  %v728 = vpop.f32.mrb[0].mxu0
  %729 = vmatprep.mubr.f32.mxu0 0.0
  %730 = vmatmul.mubr.f32.gmra.mrb[0].mxu0 %v300
  %v731 = vpop.f32.mrb[0].mxu0
  %v732 = vadd.f32 %v107, %v731
  %v733 = vpop.f32.mrb[0].mxu0
  %734 = vmatprep.mubr.f32.mxu0 0.0
  %735 = vmatmul.mubr.f32.gmra.mrb[0].mxu0 %v303
  %v736 = vpop.f32.mrb[0].mxu0
  %v737 = vadd.f32 %v107, %v736
  %v738 = vpop.f32.mrb[0].mxu0
  %739 = vmatprep.mubr.f32.mxu0 0.0
  %740 = vmatmul.mubr.f32.gmra.mrb[0].mxu0 %v306
  %v741 = vpop.f32.mrb[0].mxu0
  %v742 = vadd.f32 %v107, %v741
  %v743 = vpop.f32.mrb[0].mxu0
  %744 = vmatprep.mubr.f32.mxu0 0.0
  %745 = vmatmul.mubr.f32.gmra.mrb[0].mxu0 %v309
  %v746 = vpop.f32.mrb[0].mxu0
  %v747 = vadd.f32 %v107, %v746
  %v748 = vpop.f32.mrb[0].mxu0
  %749 = vmatprep.mubr.f32.mxu0 0.0
  %750 = vmatmul.mubr.f32.gmra.mrb[0].mxu0 %v312
  %v751 = vpop.f32.mrb[0].mxu0
  %v752 = vadd.f32 %v107, %v751
  %v753 = vpop.f32.mrb[0].mxu0
  %754 = vmatprep.mubr.f32.mxu0 0.0
  %755 = vmatmul.mubr.f32.gmra.mrb[0].mxu0 %v315
  %v756 = vpop.f32.mrb[0].mxu0
  %v757 = vadd.f32 %v107, %v756
  %v758 = vpop.f32.mrb[0].mxu0
  %759 = vmatprep.mubr.f32.mxu0 0.0
  %760 = vmatmul.mubr.f32.gmra.mrb[0].mxu0 %v318
  %v761 = vpop.f32.mrb[0].mxu0
  %v762 = vadd.f32 %v107, %v761
  %v763 = vpop.f32.mrb[0].mxu0
  %764 = vmatprep.mubr.f32.mxu0 0.0
  %765 = vmatmul.mubr.f32.gmra.mrb[0].mxu0 %v321
  %v766 = vpop.f32.mrb[0].mxu0
  %v767 = vadd.f32 %v107, %v766
  %v768 = vpop.f32.mrb[0].mxu0
  %769 = vmatprep.mubr.f32.mxu0 0.0
  %770 = vmatmul.mubr.f32.gmra.mrb[0].mxu0 %v324
  %v771 = vpop.f32.mrb[0].mxu0
  %v772 = vadd.f32 %v107, %v771
  %v773 = vpop.f32.mrb[0].mxu0
  %774 = vmatprep.mubr.f32.mxu0 0.0
  %775 = vmatmul.mubr.f32.gmra.mrb[0].mxu0 %v327
  %v776 = vpop.f32.mrb[0].mxu0
  %v777 = vadd.f32 %v107, %v776
  %v778 = vpop.f32.mrb[0].mxu0
  %779 = vmatprep.mubr.f32.mxu0 0.0
  %780 = vmatmul.mubr.f32.gmra.mrb[0].mxu0 %v330
  %v781 = vpop.f32.mrb[0].mxu0
  %v782 = vadd.f32 %v107, %v781
  %v783 = vpop.f32.mrb[0].mxu0
  %784 = vmatprep.mubr.f32.mxu0 0.0
  %785 = vmatmul.mubr.f32.gmra.mrb[0].mxu0 %v333
  %v786 = vpop.f32.mrb[0].mxu0
  %v787 = vadd.f32 %v107, %v786
  %v788 = vpop.f32.mrb[0].mxu0
  %789 = vmatprep.mubr.f32.mxu0 0.0
  %790 = vmatmul.mubr.f32.gmra.mrb[0].mxu0 %v336
  %v791 = vpop.f32.mrb[0].mxu0
  %v792 = vadd.f32 %v107, %v791
  %v793 = vpop.f32.mrb[0].mxu0
  %794 = vmatprep.mubr.f32.mxu0 0.0
  %795 = vmatmul.mubr.f32.gmra.mrb[0].mxu0 %v339
  %v796 = vpop.f32.mrb[0].mxu0
  %v797 = vadd.f32 %v107, %v796
  %v798 = vpop.f32.mrb[0].mxu0
  %799 = vmatprep.mubr.f32.mxu0 0.0
  %800 = vmatmul.mubr.f32.gmra.mrb[0].mxu0 %v342
  %v801 = vpop.f32.mrb[0].mxu0
  %v802 = vadd.f32 %v107, %v801
  %v803 = vpop.f32.mrb[0].mxu0
  %804 = vmatprep.mubr.f32.mxu0 0.0
  %805 = vmatmul.mubr.f32.gmra.mrb[0].mxu0 %v345
  %v806 = vpop.f32.mrb[0].mxu0
  %v807 = vadd.f32 %v107, %v806
  %v808 = vpop.f32.mrb[0].mxu0
  %809 = vmatprep.mubr.f32.mxu0 0.0
  %810 = vmatmul.mubr.f32.gmra.mrb[0].mxu0 %v348
  %v811 = vpop.f32.mrb[0].mxu0
  %v812 = vadd.f32 %v107, %v811
  %v813 = vpop.f32.mrb[0].mxu0
  %814 = vdwg.mxu0
  %vm815 = vcmask 261120
  %816 = vst.msk [vmem:[%s3] sm:$0xff] %vm815, %v417
  %817 = vst.msk [vmem:[%s3 + $0x8] sm:$0xff] %vm815, %v422
  %818 = vst.msk [vmem:[%s3 + $0x10] sm:$0xff] %vm815, %v427
  %819 = vst.msk [vmem:[%s3 + $0x18] sm:$0xff] %vm815, %v432
  %820 = vst.msk [vmem:[%s3 + $0x20] sm:$0xff] %vm815, %v437
  %821 = vst.msk [vmem:[%s3 + $0x28] sm:$0xff] %vm815, %v442
  %822 = vst.msk [vmem:[%s3 + $0x30] sm:$0xff] %vm815, %v447
  %823 = vst.msk [vmem:[%s3 + $0x38] sm:$0xff] %vm815, %v452
  %824 = vst.msk [vmem:[%s3 + $0x40] sm:$0xff] %vm815, %v457
  %825 = vst.msk [vmem:[%s3 + $0x48] sm:$0xff] %vm815, %v462
  %826 = vst.msk [vmem:[%s3 + $0x50] sm:$0xff] %vm815, %v467
  %827 = vst.msk [vmem:[%s3 + $0x58] sm:$0xff] %vm815, %v472
  %828 = vst.msk [vmem:[%s3 + $0x60] sm:$0xff] %vm815, %v477
  %829 = vst.msk [vmem:[%s3 + $0x68] sm:$0xff] %vm815, %v482
  %830 = vst.msk [vmem:[%s3 + $0x70] sm:$0xff] %vm815, %v487
  %831 = vst.msk [vmem:[%s3 + $0x78] sm:$0xff] %vm815, %v492
  %832 = vst.msk [vmem:[%s3 + $0x80] sm:$0xff] %vm815, %v497
  %833 = vst.msk [vmem:[%s3 + $0x88] sm:$0xff] %vm815, %v502
  %834 = vst.msk [vmem:[%s3 + $0x90] sm:$0xff] %vm815, %v507
  %835 = vst.msk [vmem:[%s3 + $0x98] sm:$0xff] %vm815, %v512
  %836 = vst.msk [vmem:[%s3 + $0xa0] sm:$0xff] %vm815, %v517
  %837 = vst.msk [vmem:[%s3 + $0xa8] sm:$0xff] %vm815, %v522
  %838 = vst.msk [vmem:[%s3 + $0xb0] sm:$0xff] %vm815, %v527
  %839 = vst.msk [vmem:[%s3 + $0xb8] sm:$0xff] %vm815, %v532
  %840 = vst.msk [vmem:[%s3 + $0xc0] sm:$0xff] %vm815, %v537
  %841 = vst.msk [vmem:[%s3 + $0xc8] sm:$0xff] %vm815, %v542
  %842 = vst.msk [vmem:[%s3 + $0xd0] sm:$0xff] %vm815, %v547
  %843 = vst.msk [vmem:[%s3 + $0xd8] sm:$0xff] %vm815, %v552
  %844 = vst.msk [vmem:[%s3 + $0xe0] sm:$0xff] %vm815, %v557
  %845 = vst.msk [vmem:[%s3 + $0xe8] sm:$0xff] %vm815, %v562
  %846 = vst.msk [vmem:[%s3 + $0xf0] sm:$0xff] %vm815, %v567
  %847 = vst.msk [vmem:[%s3 + $0xf8] sm:$0xff] %vm815, %v572
  %848 = vst.msk [vmem:[%s3 + $0x100] sm:$0xff] %vm815, %v577
  %849 = vst.msk [vmem:[%s3 + $0x108] sm:$0xff] %vm815, %v582
  %850 = vst.msk [vmem:[%s3 + $0x110] sm:$0xff] %vm815, %v587
  %851 = vst.msk [vmem:[%s3 + $0x118] sm:$0xff] %vm815, %v592
  %852 = vst.msk [vmem:[%s3 + $0x120] sm:$0xff] %vm815, %v597
  %853 = vst.msk [vmem:[%s3 + $0x128] sm:$0xff] %vm815, %v602
  %854 = vst.msk [vmem:[%s3 + $0x130] sm:$0xff] %vm815, %v607
  %855 = vst.msk [vmem:[%s3 + $0x138] sm:$0xff] %vm815, %v612
  %856 = vst.msk [vmem:[%s3 + $0x140] sm:$0xff] %vm815, %v617
  %857 = vst.msk [vmem:[%s3 + $0x148] sm:$0xff] %vm815, %v622
  %858 = vst.msk [vmem:[%s3 + $0x150] sm:$0xff] %vm815, %v627
  %859 = vst.msk [vmem:[%s3 + $0x158] sm:$0xff] %vm815, %v632
  %860 = vst.msk [vmem:[%s3 + $0x160] sm:$0xff] %vm815, %v637
  %861 = vst.msk [vmem:[%s3 + $0x168] sm:$0xff] %vm815, %v642
  %862 = vst.msk [vmem:[%s3 + $0x170] sm:$0xff] %vm815, %v647
  %863 = vst.msk [vmem:[%s3 + $0x178] sm:$0xff] %vm815, %v652
  %864 = vst.msk [vmem:[%s3 + $0x180] sm:$0xff] %vm815, %v657
  %865 = vst.msk [vmem:[%s3 + $0x188] sm:$0xff] %vm815, %v662
  %866 = vst.msk [vmem:[%s3 + $0x190] sm:$0xff] %vm815, %v667
  %867 = vst.msk [vmem:[%s3 + $0x198] sm:$0xff] %vm815, %v672
  %868 = vst.msk [vmem:[%s3 + $0x1a0] sm:$0xff] %vm815, %v677
  %869 = vst.msk [vmem:[%s3 + $0x1a8] sm:$0xff] %vm815, %v682
  %870 = vst.msk [vmem:[%s3 + $0x1b0] sm:$0xff] %vm815, %v687
  %871 = vst.msk [vmem:[%s3 + $0x1b8] sm:$0xff] %vm815, %v692
  %872 = vst.msk [vmem:[%s3 + $0x1c0] sm:$0xff] %vm815, %v697
  %873 = vst.msk [vmem:[%s3 + $0x1c8] sm:$0xff] %vm815, %v702
  %874 = vst.msk [vmem:[%s3 + $0x1d0] sm:$0xff] %vm815, %v707
  %875 = vst.msk [vmem:[%s3 + $0x1d8] sm:$0xff] %vm815, %v712
  %876 = vst.msk [vmem:[%s3 + $0x1e0] sm:$0xff] %vm815, %v717
  %877 = vst.msk [vmem:[%s3 + $0x1e8] sm:$0xff] %vm815, %v722
  %878 = vst.msk [vmem:[%s3 + $0x1f0] sm:$0xff] %vm815, %v727
  %879 = vst.msk [vmem:[%s3 + $0x1f8] sm:$0xff] %vm815, %v732
  %880 = vst.msk [vmem:[%s3 + $0x200] sm:$0xff] %vm815, %v737
  %881 = vst.msk [vmem:[%s3 + $0x208] sm:$0xff] %vm815, %v742
  %882 = vst.msk [vmem:[%s3 + $0x210] sm:$0xff] %vm815, %v747
  %883 = vst.msk [vmem:[%s3 + $0x218] sm:$0xff] %vm815, %v752
  %884 = vst.msk [vmem:[%s3 + $0x220] sm:$0xff] %vm815, %v757
  %885 = vst.msk [vmem:[%s3 + $0x228] sm:$0xff] %vm815, %v762
  %886 = vst.msk [vmem:[%s3 + $0x230] sm:$0xff] %vm815, %v767
  %887 = vst.msk [vmem:[%s3 + $0x238] sm:$0xff] %vm815, %v772
  %888 = vst.msk [vmem:[%s3 + $0x240] sm:$0xff] %vm815, %v777
  %889 = vst.msk [vmem:[%s3 + $0x248] sm:$0xff] %vm815, %v782
  %890 = vst.msk [vmem:[%s3 + $0x250] sm:$0xff] %vm815, %v787
  %891 = vst.msk [vmem:[%s3 + $0x258] sm:$0xff] %vm815, %v792
  %892 = vst.msk [vmem:[%s3 + $0x260] sm:$0xff] %vm815, %v797
  %893 = vst.msk [vmem:[%s3 + $0x268] sm:$0xff] %vm815, %v802
  %894 = vst.msk [vmem:[%s3 + $0x270] sm:$0xff] %vm815, %v807
  %895 = vst.msk [vmem:[%s3 + $0x278] sm:$0xff] %vm815, %v812
  // Predicated region
  $region14: #{tpu_custom_call.1} parent=0 // pred_check
    _
  $region15: #{tpu_custom_call.1} parent=0 // pred_check_branch
    %897 = sbr.rel (0) target = $region17
  $region16: #{tpu_custom_call.1} parent=0 // pred_region
    _
  $region17: #{tpu_custom_call.1} parent=0 // pred_fallthru
    _
  // Predicated region
  $region18: #{tpu_custom_call.1} parent=0 // pred_check
    _
  $region19: #{tpu_custom_call.1} parent=0 // pred_check_branch
    %899 = sbr.rel (0) target = $region21
  $region20: #{tpu_custom_call.1} parent=0 // pred_region
    _
  $region21: #{tpu_custom_call.1} parent=0 // pred_fallthru
    _

</llo_original>
